<compile_context>
chip_gen: v5e
topology: v5e:2x2
jax: 0.10.0
libtpu: 0.0.40
codegen_flags: <defaults>
</compile_context>

<pallas_src>
import functools

import numpy as np
import jax
import jax.numpy as jnp
from jax import lax
from jax.experimental import pallas as pl
from jax.experimental.pallas import tpu as pltpu


# ------------------------------ Pallas kernel ------------------------------ #

def _conv3x3_im2col(a, buf_ref, W, mask_l, mask_r):
    """im2col patch matrix for a 3x3 / padding=1 conv, channel-major layout.

    a        : (C, H*W) activation, flat row-major spatial on the lane axis.
    buf_ref  : VMEM scratch of shape (>=C, H*W + 2*(W+1)); `a` is written into
               it with a zero gutter of W+1 lanes on each side so every tap is
               a static lane-offset slice of the buffer.
    mask_l/r : (1, H*W) masks zeroing the j==0 / j==W-1 columns (removes the
               row-to-row wrap of the +-1 horizontal taps).
    Returns (9*C, H*W); row order (ki*3+kj)*C + ci matches w.reshape(9*C, Cout).
    """
    C, HW = a.shape
    G = W + 1
    L = HW + 2 * G
    buf_ref[0:C, :] = jnp.zeros((C, L), a.dtype)      # zero the gutters
    buf_ref[0:C, G:G + HW] = a                        # "pad" by placement
    ml = jnp.broadcast_to(mask_l, (C, HW))            # hoisted broadcasts
    mr = jnp.broadcast_to(mask_r, (C, HW))
    taps = []
    for di in (-1, 0, 1):
        for dj in (-1, 0, 1):
            s = G + di * W + dj
            tap = buf_ref[0:C, s:s + HW]              # flat shifted window
            if dj == -1:
                tap = tap * ml
            elif dj == 1:
                tap = tap * mr
            taps.append(tap)
    return jnp.concatenate(taps, axis=0)              # (9*C, H*W)


def basic_block_kernel(x_ref, w1_ref, w2s_ref, s1_ref, b1_ref, s2_ref, b2_ref,
                       mask_ref, o_ref, buf_ref, *, W):
    """Whole residual block for one image, fully fused, VMEM-resident."""
    x = x_ref[0]                                      # (Cinp, H*W) channel-major
    m = mask_ref[...]
    mask_l, mask_r = m[0:1], m[1:2]                   # (1, H*W) each

    # bn1 + relu (BN folded wrapper-side into per-channel scale/bias columns).
    a1 = jnp.maximum(x * s1_ref[...] + b1_ref[...], 0.0)

    # conv1 as a single MXU matmul on the im2col patch matrix.
    p1 = _conv3x3_im2col(a1, buf_ref, W, mask_l, mask_r)        # (9*Cinp, HW)
    o1 = jnp.dot(w1_ref[...], p1, preferred_element_type=jnp.float32)
    # TODO(synk): dropout is an eval-mode identity; training-mode RNG mask omitted.

    # bn2 + relu.
    a2 = jnp.maximum(o1 * s2_ref[...] + b2_ref[...], 0.0)

    # conv2 with the 1x1 shortcut folded into the same contraction.
    p2 = _conv3x3_im2col(a2, buf_ref, W, mask_l, mask_r)        # (9*Cout, HW)
    p2 = jnp.concatenate([p2, x], axis=0)                       # + shortcut rows
    out = jnp.dot(w2s_ref[...], p2, preferred_element_type=jnp.float32)
    o_ref[0] = out.astype(o_ref.dtype)                          # lane-dense store


# ------------------------------- Wrapper ----------------------------------- #

def basic_block_mnist(x_nchw, params, *, eps=1e-5):
    """Pallas implementation of BasicBlockMNIST.forward (eval mode, stride=1)."""
    # TODO(synk): stride != 1 not implemented (the demo instantiates stride=1).
    N, Cin, H, W = x_nchw.shape
    Cout = params["w1"].shape[-1]
    HW = H * W

    # Channel-major (== flattened NCHW) activations: no transposes, only reshapes.
    x = x_nchw.reshape(N, Cin, HW).astype(jnp.float32)

    # Pad input channels up to a sublane multiple so all in-kernel tap pieces
    # are 8-row aligned (padded channels carry zero weights -> no effect).
    Cinp = max(8, ((Cin + 7) // 8) * 8)
    pc = Cinp - Cin
    xp = jnp.pad(x, ((0, 0), (0, pc), (0, 0)))

    # Fold eval-mode BN (running stats) into per-channel scale/bias columns.
    s1 = (params["gamma1"] / jnp.sqrt(params["var1"] + eps)).reshape(Cin, 1)
    b1 = params["beta1"].reshape(Cin, 1) - params["mean1"].reshape(Cin, 1) * s1
    s2 = (params["gamma2"] / jnp.sqrt(params["var2"] + eps)).reshape(Cout, 1)
    b2 = params["beta2"].reshape(Cout, 1) - params["mean2"].reshape(Cout, 1) * s2
    s1 = jnp.pad(s1, ((0, pc), (0, 0)))
    b1 = jnp.pad(b1, ((0, pc), (0, 0)))

    # im2col weights, transposed for channel-major (Cout, K) x (K, HW) matmuls.
    w1p = jnp.pad(params["w1"], ((0, 0), (0, 0), (0, pc), (0, 0)))
    w1_t = w1p.reshape(9 * Cinp, Cout).T                        # (Cout, 9*Cinp)
    w2_t = params["w2"].reshape(9 * Cout, Cout).T               # (Cout, 9*Cout)
    ws_t = jnp.pad(params["ws"], ((0, pc), (0, 0))).T           # (Cout, Cinp)
    w2s = jnp.concatenate([w2_t, ws_t], axis=1)      # conv2 + shortcut weights

    # Column-wrap masks for the flat lane shifts (dj = -1 / +1 taps).
    j = jnp.arange(HW, dtype=jnp.int32) % W
    colmask = jnp.stack([(j != 0), (j != W - 1)]).astype(jnp.float32)  # (2, HW)

    Cbuf = max(Cinp, Cout)
    kernel = functools.partial(basic_block_kernel, W=W)

    out = pl.pallas_call(
        kernel,
        out_shape=jax.ShapeDtypeStruct((N, Cout, HW), jnp.float32),
        grid=(N,),
        in_specs=[
            pl.BlockSpec((1, Cinp, HW), lambda n: (n, 0, 0)),
            pl.BlockSpec((Cout, 9 * Cinp), lambda n: (0, 0)),
            pl.BlockSpec((Cout, 9 * Cout + Cinp), lambda n: (0, 0)),
            pl.BlockSpec((Cinp, 1), lambda n: (0, 0)),
            pl.BlockSpec((Cinp, 1), lambda n: (0, 0)),
            pl.BlockSpec((Cout, 1), lambda n: (0, 0)),
            pl.BlockSpec((Cout, 1), lambda n: (0, 0)),
            pl.BlockSpec((2, HW), lambda n: (0, 0)),
        ],
        out_specs=pl.BlockSpec((1, Cout, HW), lambda n: (n, 0, 0)),
        scratch_shapes=[pltpu.VMEM((Cbuf, HW + 2 * (W + 1)), jnp.float32)],
        compiler_params=pltpu.CompilerParams(
            dimension_semantics=("parallel",)),       # v7x: one image per core
    )(xp, w1_t, w2s, s1, b1, s2, b2, colmask)

    return out.reshape(N, Cout, H, W)                 # channel-major == NCHW


# ---------------------- Deterministic parameter init ----------------------- #

def init_params(key, in_channels, out_channels):
    ks = jax.random.split(key, 12)

    def conv_init(k, shape, fan_in):
        bound = 1.0 / np.sqrt(fan_in)
        return jax.random.uniform(k, shape, jnp.float32, -bound, bound)

    w1 = conv_init(ks[0], (3, 3, in_channels, out_channels), 9 * in_channels)
    w2 = conv_init(ks[1], (3, 3, out_channels, out_channels), 9 * out_channels)
    if in_channels != out_channels:
        ws = conv_init(ks[2], (in_channels, out_channels), in_channels)
    else:
        ws = jnp.eye(in_channels, dtype=jnp.float32)  # identity shortcut

    return dict(
        w1=w1, w2=w2, ws=ws,
        gamma1=1.0 + 0.1 * jax.random.normal(ks[3], (in_channels,), jnp.float32),
        beta1=0.1 * jax.random.normal(ks[4], (in_channels,), jnp.float32),
        mean1=0.05 * jax.random.normal(ks[5], (in_channels,), jnp.float32),
        var1=jax.random.uniform(ks[6], (in_channels,), jnp.float32, 0.5, 1.5),
        gamma2=1.0 + 0.1 * jax.random.normal(ks[7], (out_channels,), jnp.float32),
        beta2=0.1 * jax.random.normal(ks[8], (out_channels,), jnp.float32),
        mean2=0.05 * jax.random.normal(ks[9], (out_channels,), jnp.float32),
        var2=jax.random.uniform(ks[10], (out_channels,), jnp.float32, 0.5, 1.5),
    )


# ------------------------- Pure-JAX reference check ------------------------ #

def reference_block(x_nchw, params, *, eps=1e-5):
    x = jnp.transpose(x_nchw, (0, 2, 3, 1)).astype(jnp.float32)
    Cin = x.shape[-1]
    Cout = params["w1"].shape[-1]

    def bn(v, g, b, m, var):
        return (v - m) / jnp.sqrt(var + eps) * g + b

    dn = ("NHWC", "HWIO", "NHWC")
    a1 = jax.nn.relu(bn(x, params["gamma1"], params["beta1"],
                        params["mean1"], params["var1"]))
    o1 = lax.conv_general_dilated(a1, params["w1"], (1, 1), ((1, 1), (1, 1)),
                                  dimension_numbers=dn,
                                  precision=lax.Precision.HIGHEST)
    a2 = jax.nn.relu(bn(o1, params["gamma2"], params["beta2"],
                        params["mean2"], params["var2"]))
    o2 = lax.conv_general_dilated(a2, params["w2"], (1, 1), ((1, 1), (1, 1)),
                                  dimension_numbers=dn,
                                  precision=lax.Precision.HIGHEST)
    sc = lax.conv_general_dilated(x, params["ws"].reshape(1, 1, Cin, Cout),
                                  (1, 1), ((0, 0), (0, 0)),
                                  dimension_numbers=dn,
                                  precision=lax.Precision.HIGHEST)
    return jnp.transpose(o2 + sc, (0, 3, 1, 2))


# ---------------------------------- Main ------------------------------------ #

if __name__ == "__main__":
    key = jax.random.PRNGKey(0)
    kx, kp = jax.random.split(key)

    N, Cin, Cout, H, W = 2, 4, 8, 16, 16            # stride = 1
    x = jax.random.normal(kx, (N, Cin, H, W), jnp.float32)  # PyTorch NCHW
    params = init_params(kp, Cin, Cout)

    out = jax.block_until_ready(basic_block_mnist(x, params))
    ref = jax.block_until_ready(reference_block(x, params))

    assert out.shape == (N, Cout, H, W), out.shape
    max_err = float(jnp.max(jnp.abs(out - ref)))
    assert max_err < 2e-3, f"max abs error vs reference: {max_err}"

    print("KERNEL_OK")
</pallas_src>

<mosaic_0001>
module attributes {stable_mosaic.version = 11 : i64} {
  func.func @basic_block_kernel(%arg0: i32, %arg1: memref<1x8x256xf32, #tpu.memory_space<vmem>>, %arg2: memref<8x72xf32, #tpu.memory_space<vmem>>, %arg3: memref<8x80xf32, #tpu.memory_space<vmem>>, %arg4: memref<8x1xf32, #tpu.memory_space<vmem>>, %arg5: memref<8x1xf32, #tpu.memory_space<vmem>>, %arg6: memref<8x1xf32, #tpu.memory_space<vmem>>, %arg7: memref<8x1xf32, #tpu.memory_space<vmem>>, %arg8: memref<2x256xf32, #tpu.memory_space<vmem>>, %arg9: memref<1x8x256xf32, #tpu.memory_space<vmem>>, %arg10: memref<8x290xf32, #tpu.memory_space<vmem>>) attributes {dimension_semantics = [#tpu.dimension_semantics<parallel>], iteration_bounds = array<i64: 2>, scalar_prefetch = 0 : i64, scratch_operands = 1 : i64, tpu.core_type = #tpu.core_type<tc>, window_params = [{transform_indices = @transform_0, window_bounds = array<i64: 1, 8, 256>}, {pipeline_mode = #tpu.pipeline_mode<synchronous>, transform_indices = @transform_1, window_bounds = array<i64: 8, 72>}, {pipeline_mode = #tpu.pipeline_mode<synchronous>, transform_indices = @transform_2, window_bounds = array<i64: 8, 80>}, {pipeline_mode = #tpu.pipeline_mode<synchronous>, transform_indices = @transform_3, window_bounds = array<i64: 8, 1>}, {pipeline_mode = #tpu.pipeline_mode<synchronous>, transform_indices = @transform_4, window_bounds = array<i64: 8, 1>}, {pipeline_mode = #tpu.pipeline_mode<synchronous>, transform_indices = @transform_5, window_bounds = array<i64: 8, 1>}, {pipeline_mode = #tpu.pipeline_mode<synchronous>, transform_indices = @transform_6, window_bounds = array<i64: 8, 1>}, {pipeline_mode = #tpu.pipeline_mode<synchronous>, transform_indices = @transform_7, window_bounds = array<i64: 2, 256>}, {transform_indices = @transform_8, window_bounds = array<i64: 1, 8, 256>}]} {
    %c0 = arith.constant 0 : index
    %c0_0 = arith.constant 0 : index
    %c0_1 = arith.constant 0 : index
    %0 = vector.load %arg1[%c0, %c0_0, %c0_1] : memref<1x8x256xf32, #tpu.memory_space<vmem>>, vector<1x8x256xf32>
    %1 = vector.shape_cast %0 : vector<1x8x256xf32> to vector<8x256xf32>
    %c0_2 = arith.constant 0 : index
    %c0_3 = arith.constant 0 : index
    %2 = vector.load %arg8[%c0_2, %c0_3] : memref<2x256xf32, #tpu.memory_space<vmem>>, vector<2x256xf32>
    %3 = vector.extract_strided_slice %2 {offsets = [0, 0], sizes = [1, 256], strides = [1, 1]} : vector<2x256xf32> to vector<1x256xf32>
    %4 = vector.extract_strided_slice %2 {offsets = [1, 0], sizes = [1, 256], strides = [1, 1]} : vector<2x256xf32> to vector<1x256xf32>
    %c0_4 = arith.constant 0 : index
    %c0_5 = arith.constant 0 : index
    %5 = vector.load %arg4[%c0_4, %c0_5] : memref<8x1xf32, #tpu.memory_space<vmem>>, vector<8x1xf32>
    %6 = vector.broadcast %5 : vector<8x1xf32> to vector<8x256xf32>
    %7 = arith.mulf %1, %6 : vector<8x256xf32>
    %c0_6 = arith.constant 0 : index
    %c0_7 = arith.constant 0 : index
    %8 = vector.load %arg5[%c0_6, %c0_7] : memref<8x1xf32, #tpu.memory_space<vmem>>, vector<8x1xf32>
    %9 = vector.broadcast %8 : vector<8x1xf32> to vector<8x256xf32>
    %10 = arith.addf %7, %9 : vector<8x256xf32>
    %cst = arith.constant 0.000000e+00 : f32
    %11 = vector.broadcast %cst : f32 to vector<8x256xf32>
    %12 = arith.maximumf %10, %11 : vector<8x256xf32>
    %cst_8 = arith.constant 0.000000e+00 : f32
    %13 = vector.broadcast %cst_8 : f32 to vector<8x290xf32>
    %c0_9 = arith.constant 0 : index
    %c0_10 = arith.constant 0 : index
    %14 = vector.load %arg10[%c0_9, %c0_10] : memref<8x290xf32, #tpu.memory_space<vmem>>, vector<8x290xf32>
    tpu.vector_store %arg10[%c0_9, %c0_10], %13 {strides = array<i32>} : memref<8x290xf32, #tpu.memory_space<vmem>>, vector<8x290xf32>,
    %c0_11 = arith.constant 0 : index
    %c17 = arith.constant 17 : index
    %15 = vector.load %arg10[%c0_11, %c17] : memref<8x290xf32, #tpu.memory_space<vmem>>, vector<8x256xf32>
    tpu.vector_store %arg10[%c0_11, %c17], %12 {strides = array<i32>} : memref<8x290xf32, #tpu.memory_space<vmem>>, vector<8x256xf32>,
    %16 = vector.shape_cast %3 : vector<1x256xf32> to vector<1x256xf32>
    %17 = vector.broadcast %16 : vector<1x256xf32> to vector<8x256xf32>
    %18 = vector.shape_cast %4 : vector<1x256xf32> to vector<1x256xf32>
    %19 = vector.broadcast %18 : vector<1x256xf32> to vector<8x256xf32>
    %c0_12 = arith.constant 0 : index
    %c0_13 = arith.constant 0 : index
    %20 = vector.load %arg10[%c0_12, %c0_13] : memref<8x290xf32, #tpu.memory_space<vmem>>, vector<8x256xf32>
    %21 = arith.mulf %20, %17 : vector<8x256xf32>
    %c0_14 = arith.constant 0 : index
    %c1 = arith.constant 1 : index
    %22 = vector.load %arg10[%c0_14, %c1] : memref<8x290xf32, #tpu.memory_space<vmem>>, vector<8x256xf32>
    %c0_15 = arith.constant 0 : index
    %c2 = arith.constant 2 : index
    %23 = vector.load %arg10[%c0_15, %c2] : memref<8x290xf32, #tpu.memory_space<vmem>>, vector<8x256xf32>
    %24 = arith.mulf %23, %19 : vector<8x256xf32>
    %c0_16 = arith.constant 0 : index
    %c16 = arith.constant 16 : index
    %25 = vector.load %arg10[%c0_16, %c16] : memref<8x290xf32, #tpu.memory_space<vmem>>, vector<8x256xf32>
    %26 = arith.mulf %25, %17 : vector<8x256xf32>
    %c0_17 = arith.constant 0 : index
    %c17_18 = arith.constant 17 : index
    %27 = vector.load %arg10[%c0_17, %c17_18] : memref<8x290xf32, #tpu.memory_space<vmem>>, vector<8x256xf32>
    %c0_19 = arith.constant 0 : index
    %c18 = arith.constant 18 : index
    %28 = vector.load %arg10[%c0_19, %c18] : memref<8x290xf32, #tpu.memory_space<vmem>>, vector<8x256xf32>
    %29 = arith.mulf %28, %19 : vector<8x256xf32>
    %c0_20 = arith.constant 0 : index
    %c32 = arith.constant 32 : index
    %30 = vector.load %arg10[%c0_20, %c32] : memref<8x290xf32, #tpu.memory_space<vmem>>, vector<8x256xf32>
    %31 = arith.mulf %30, %17 : vector<8x256xf32>
    %c0_21 = arith.constant 0 : index
    %c33 = arith.constant 33 : index
    %32 = vector.load %arg10[%c0_21, %c33] : memref<8x290xf32, #tpu.memory_space<vmem>>, vector<8x256xf32>
    %c0_22 = arith.constant 0 : index
    %c34 = arith.constant 34 : index
    %33 = vector.load %arg10[%c0_22, %c34] : memref<8x290xf32, #tpu.memory_space<vmem>>, vector<8x256xf32>
    %34 = arith.mulf %33, %19 : vector<8x256xf32>
    %35 = tpu.concatenate %21, %22, %24, %26, %27, %29, %31, %32, %34 in 0 : vector<8x256xf32>, vector<8x256xf32>, vector<8x256xf32>, vector<8x256xf32>, vector<8x256xf32>, vector<8x256xf32>, vector<8x256xf32>, vector<8x256xf32>, vector<8x256xf32> -> vector<72x256xf32>
    %c0_23 = arith.constant 0 : index
    %c0_24 = arith.constant 0 : index
    %36 = vector.load %arg2[%c0_23, %c0_24] : memref<8x72xf32, #tpu.memory_space<vmem>>, vector<8x72xf32>
    %cst_25 = arith.constant dense<0.000000e+00> : vector<8x256xf32>
    %37 = tpu.matmul %36, %35, %cst_25 {dimension_numbers = #tpu.dot_dimension_numbers<[1], [0], [0], [1], [0, 0, 1, 1], [], []>} : vector<8x72xf32>, vector<72x256xf32>, vector<8x256xf32> -> vector<8x256xf32>
    %c0_26 = arith.constant 0 : index
    %c0_27 = arith.constant 0 : index
    %38 = vector.load %arg6[%c0_26, %c0_27] : memref<8x1xf32, #tpu.memory_space<vmem>>, vector<8x1xf32>
    %39 = vector.broadcast %38 : vector<8x1xf32> to vector<8x256xf32>
    %40 = arith.mulf %37, %39 : vector<8x256xf32>
    %c0_28 = arith.constant 0 : index
    %c0_29 = arith.constant 0 : index
    %41 = vector.load %arg7[%c0_28, %c0_29] : memref<8x1xf32, #tpu.memory_space<vmem>>, vector<8x1xf32>
    %42 = vector.broadcast %41 : vector<8x1xf32> to vector<8x256xf32>
    %43 = arith.addf %40, %42 : vector<8x256xf32>
    %cst_30 = arith.constant 0.000000e+00 : f32
    %44 = vector.broadcast %cst_30 : f32 to vector<8x256xf32>
    %45 = arith.maximumf %43, %44 : vector<8x256xf32>
    %cst_31 = arith.constant 0.000000e+00 : f32
    %46 = vector.broadcast %cst_31 : f32 to vector<8x290xf32>
    %c0_32 = arith.constant 0 : index
    %c0_33 = arith.constant 0 : index
    %47 = vector.load %arg10[%c0_32, %c0_33] : memref<8x290xf32, #tpu.memory_space<vmem>>, vector<8x290xf32>
    tpu.vector_store %arg10[%c0_32, %c0_33], %46 {strides = array<i32>} : memref<8x290xf32, #tpu.memory_space<vmem>>, vector<8x290xf32>,
    %c0_34 = arith.constant 0 : index
    %c17_35 = arith.constant 17 : index
    %48 = vector.load %arg10[%c0_34, %c17_35] : memref<8x290xf32, #tpu.memory_space<vmem>>, vector<8x256xf32>
    tpu.vector_store %arg10[%c0_34, %c17_35], %45 {strides = array<i32>} : memref<8x290xf32, #tpu.memory_space<vmem>>, vector<8x256xf32>,
    %49 = vector.shape_cast %3 : vector<1x256xf32> to vector<1x256xf32>
    %50 = vector.broadcast %49 : vector<1x256xf32> to vector<8x256xf32>
    %51 = vector.shape_cast %4 : vector<1x256xf32> to vector<1x256xf32>
    %52 = vector.broadcast %51 : vector<1x256xf32> to vector<8x256xf32>
    %c0_36 = arith.constant 0 : index
    %c0_37 = arith.constant 0 : index
    %53 = vector.load %arg10[%c0_36, %c0_37] : memref<8x290xf32, #tpu.memory_space<vmem>>, vector<8x256xf32>
    %54 = arith.mulf %53, %50 : vector<8x256xf32>
    %c0_38 = arith.constant 0 : index
    %c1_39 = arith.constant 1 : index
    %55 = vector.load %arg10[%c0_38, %c1_39] : memref<8x290xf32, #tpu.memory_space<vmem>>, vector<8x256xf32>
    %c0_40 = arith.constant 0 : index
    %c2_41 = arith.constant 2 : index
    %56 = vector.load %arg10[%c0_40, %c2_41] : memref<8x290xf32, #tpu.memory_space<vmem>>, vector<8x256xf32>
    %57 = arith.mulf %56, %52 : vector<8x256xf32>
    %c0_42 = arith.constant 0 : index
    %c16_43 = arith.constant 16 : index
    %58 = vector.load %arg10[%c0_42, %c16_43] : memref<8x290xf32, #tpu.memory_space<vmem>>, vector<8x256xf32>
    %59 = arith.mulf %58, %50 : vector<8x256xf32>
    %c0_44 = arith.constant 0 : index
    %c17_45 = arith.constant 17 : index
    %60 = vector.load %arg10[%c0_44, %c17_45] : memref<8x290xf32, #tpu.memory_space<vmem>>, vector<8x256xf32>
    %c0_46 = arith.constant 0 : index
    %c18_47 = arith.constant 18 : index
    %61 = vector.load %arg10[%c0_46, %c18_47] : memref<8x290xf32, #tpu.memory_space<vmem>>, vector<8x256xf32>
    %62 = arith.mulf %61, %52 : vector<8x256xf32>
    %c0_48 = arith.constant 0 : index
    %c32_49 = arith.constant 32 : index
    %63 = vector.load %arg10[%c0_48, %c32_49] : memref<8x290xf32, #tpu.memory_space<vmem>>, vector<8x256xf32>
    %64 = arith.mulf %63, %50 : vector<8x256xf32>
    %c0_50 = arith.constant 0 : index
    %c33_51 = arith.constant 33 : index
    %65 = vector.load %arg10[%c0_50, %c33_51] : memref<8x290xf32, #tpu.memory_space<vmem>>, vector<8x256xf32>
    %c0_52 = arith.constant 0 : index
    %c34_53 = arith.constant 34 : index
    %66 = vector.load %arg10[%c0_52, %c34_53] : memref<8x290xf32, #tpu.memory_space<vmem>>, vector<8x256xf32>
    %67 = arith.mulf %66, %52 : vector<8x256xf32>
    %68 = tpu.concatenate %54, %55, %57, %59, %60, %62, %64, %65, %67 in 0 : vector<8x256xf32>, vector<8x256xf32>, vector<8x256xf32>, vector<8x256xf32>, vector<8x256xf32>, vector<8x256xf32>, vector<8x256xf32>, vector<8x256xf32>, vector<8x256xf32> -> vector<72x256xf32>
    %69 = tpu.concatenate %68, %1 in 0 : vector<72x256xf32>, vector<8x256xf32> -> vector<80x256xf32>
    %c0_54 = arith.constant 0 : index
    %c0_55 = arith.constant 0 : index
    %70 = vector.load %arg3[%c0_54, %c0_55] : memref<8x80xf32, #tpu.memory_space<vmem>>, vector<8x80xf32>
    %cst_56 = arith.constant dense<0.000000e+00> : vector<8x256xf32>
    %71 = tpu.matmul %70, %69, %cst_56 {dimension_numbers = #tpu.dot_dimension_numbers<[1], [0], [0], [1], [0, 0, 1, 1], [], []>} : vector<8x80xf32>, vector<80x256xf32>, vector<8x256xf32> -> vector<8x256xf32>
    %c0_57 = arith.constant 0 : index
    %c0_58 = arith.constant 0 : index
    %c0_59 = arith.constant 0 : index
    %72 = vector.load %arg9[%c0_57, %c0_58, %c0_59] : memref<1x8x256xf32, #tpu.memory_space<vmem>>, vector<1x8x256xf32>
    %73 = vector.shape_cast %72 : vector<1x8x256xf32> to vector<8x256xf32>
    %74 = vector.shape_cast %71 : vector<8x256xf32> to vector<1x8x256xf32>
    tpu.vector_store %arg9[%c0_57, %c0_58, %c0_59], %74 {strides = array<i32>} : memref<1x8x256xf32, #tpu.memory_space<vmem>>, vector<1x8x256xf32>,
    return
  }
  func.func @transform_0(%arg0: i32) -> (i32, i32, i32) {
    %c0_i32 = arith.constant 0 : i32
    %c0_i32_0 = arith.constant 0 : i32
    %c0_i32_1 = arith.constant 0 : i32
    return %arg0, %c0_i32, %c0_i32_0 : i32, i32, i32
  }
  func.func @transform_1(%arg0: i32) -> (i32, i32) {
    %c0_i32 = arith.constant 0 : i32
    %c0_i32_0 = arith.constant 0 : i32
    %c0_i32_1 = arith.constant 0 : i32
    return %c0_i32, %c0_i32_0 : i32, i32
  }
  func.func @transform_2(%arg0: i32) -> (i32, i32) {
    %c0_i32 = arith.constant 0 : i32
    %c0_i32_0 = arith.constant 0 : i32
    %c0_i32_1 = arith.constant 0 : i32
    return %c0_i32, %c0_i32_0 : i32, i32
  }
  func.func @transform_3(%arg0: i32) -> (i32, i32) {
    %c0_i32 = arith.constant 0 : i32
    %c0_i32_0 = arith.constant 0 : i32
    %c0_i32_1 = arith.constant 0 : i32
    return %c0_i32, %c0_i32_0 : i32, i32
  }
  func.func @transform_4(%arg0: i32) -> (i32, i32) {
    %c0_i32 = arith.constant 0 : i32
    %c0_i32_0 = arith.constant 0 : i32
    %c0_i32_1 = arith.constant 0 : i32
    return %c0_i32, %c0_i32_0 : i32, i32
  }
  func.func @transform_5(%arg0: i32) -> (i32, i32) {
    %c0_i32 = arith.constant 0 : i32
    %c0_i32_0 = arith.constant 0 : i32
    %c0_i32_1 = arith.constant 0 : i32
    return %c0_i32, %c0_i32_0 : i32, i32
  }
  func.func @transform_6(%arg0: i32) -> (i32, i32) {
    %c0_i32 = arith.constant 0 : i32
    %c0_i32_0 = arith.constant 0 : i32
    %c0_i32_1 = arith.constant 0 : i32
    return %c0_i32, %c0_i32_0 : i32, i32
  }
  func.func @transform_7(%arg0: i32) -> (i32, i32) {
    %c0_i32 = arith.constant 0 : i32
    %c0_i32_0 = arith.constant 0 : i32
    %c0_i32_1 = arith.constant 0 : i32
    return %c0_i32, %c0_i32_0 : i32, i32
  }
  func.func @transform_8(%arg0: i32) -> (i32, i32, i32) {
    %c0_i32 = arith.constant 0 : i32
    %c0_i32_0 = arith.constant 0 : i32
    %c0_i32_1 = arith.constant 0 : i32
    return %arg0, %c0_i32, %c0_i32_0 : i32, i32, i32
  }
}

</mosaic_0001>

<llo_original>
// kernel: tpu_custom_call.1
$region0: #{tpu_custom_call.1}
  #allocation0 [shape = 'u32[]', space=smem, size = 0x4, offset = 0x4, fixed_abs, tag = 'smem constant byte address 0x4 - core index']
  #allocation1 [shape = 'u32[72,128]{1,0:T(1,128)}', space=vmem, size = 0x9000, scoped, tag = 'internal scratch']
  #allocation2 [shape = 'f32[8,290]{1,0:T(8,128)}', space=vmem, size = 0x3000, scoped, tag = 'scratch operand']
  %s0 = inlined_call_operand.hbm [shape: f32[2,8,256], index: 0, kind: input, shape index: {}]
  %s1 = inlined_call_operand.vmem [shape: f32[8,72], index: 1, kind: input, shape index: {}]
  %s2 = inlined_call_operand.vmem [shape: f32[8,80], index: 2, kind: input, shape index: {}]
  %s3 = inlined_call_operand.vmem [shape: f32[8,1], index: 3, kind: input, shape index: {}]
  %s4 = inlined_call_operand.vmem [shape: f32[8,1], index: 4, kind: input, shape index: {}]
  %s5 = inlined_call_operand.vmem [shape: f32[8,1], index: 5, kind: input, shape index: {}]
  %s6 = inlined_call_operand.vmem [shape: f32[8,1], index: 6, kind: input, shape index: {}]
  %s7 = inlined_call_operand.vmem [shape: f32[2,256], index: 7, kind: input, shape index: {}]
  %s8 = inlined_call_operand.hbm [shape: f32[2,8,256], index: 8, kind: output, shape index: {}]
  %s9 = sld [smem:[#allocation0]]
  $region69: #{tpu_custom_call.1} parent=0
    _
  %s11 = ssub.s32 1, %s9
  %s12 = scalar_select 0, %s11, %s9
  $region1: #{tpu_custom_call.1} parent=0
    #allocation3 [shape = 'u8[16384]{0}', space=vmem, size = 0x4000, scoped, tag = 'input window, operand 0']
    #allocation4 [shape = 's32[2]{0}', space=sflag, size = 0x8, scoped, tag = 'scoped memory for tpu_custom_call.1']
    #allocation5 [shape = 's32[2]{0}', space=sflag, size = 0x8, scoped, tag = 'scoped memory for tpu_custom_call.1']
    #allocation6 [shape = 'u8[16384]{0}', space=vmem, size = 0x4000, scoped, tag = 'output window, operand 0']
    %13 = vsyncpa [#allocation4], 0
    %s14 = scalar_lea.sflag [#allocation4], 1
    %15 = vsyncpa %s14, 0
    %16 = vsyncpa [#allocation5], 0
    %s17 = scalar_lea.sflag [#allocation5], 1
    %18 = vsyncpa %s17, 0
    loop: start=0, step=1, limit=4
    $region2: #{tpu_custom_call.1} parent=1 // loop_pre_header
      _
    $region3: #{tpu_custom_call.1} parent=1 // loop_header
      %s20 = sphi 0, %s24
      %p21 = scmp.ge.s32.totalorder %s20, 4
      %s30 = sphi 0, %s32
      %s33 = sphi 0, %s30
      %s34 = sphi 0, %s33
      %s50 = sphi 0, %s34
      %s54 = sphi 0, %s54
      %s56 = sphi 0, %s54
      %s57 = sphi 0, %s56
      %s71 = sphi 0, %s57
      %s75 = sphi 0, %s75
      %s77 = sphi 0, %s75
      %s78 = sphi 0, %s77
      %s92 = sphi 0, %s78
      %s96 = sphi 0, %s96
      %s98 = sphi 0, %s96
      %s99 = sphi 0, %s98
      %s113 = sphi 0, %s99
      %s117 = sphi 0, %s117
      %s119 = sphi 0, %s117
      %s120 = sphi 0, %s119
      %s134 = sphi 0, %s120
      %s138 = sphi 0, %s138
      %s140 = sphi 0, %s138
      %s141 = sphi 0, %s140
      %s155 = sphi 0, %s141
      %s159 = sphi 0, %s159
      %s161 = sphi 0, %s159
      %s162 = sphi 0, %s161
      %s176 = sphi 0, %s162
      %s180 = sphi 0, %s180
      %s182 = sphi 0, %s180
      %s183 = sphi 0, %s182
      %s197 = sphi 0, %s183
      %s203 = sphi 0, %s205
      %s206 = sphi 0, %s203
      %s207 = sphi 0, %s206
      %s223 = sphi 0, %s207
    $region4: #{tpu_custom_call.1} parent=1 // loop_header_branch
      %23 = sbr.rel (%p21) target = $region8
    $region5: #{tpu_custom_call.1} parent=1 // loop_body
      %s25 = ssub.s32 %s20, 1
      %s26 = ssub.s32 %s20, 2
      %s27 = sadd.s32 %s20, 1
      %s28 = ssub.s32 %s20, %s27
      %p29 = scmp.eq.s32.totalorder %s28, 0
      %s31 = sadd.s32 %s30, 1
      %s32 = scalar_select %p29, %s30, %s31
      %p35 = pneg %p29
      %p36 = scmp.eq.s32.totalorder %s20, 1
      %p37 = por %p35, %p36
      %p38 = scmp.ne.s32.totalorder %s30, %s33
      %p39 = scmp.eq.s32.totalorder %s20, 0
      %p40 = por %p38, %p39
      %p41 = scmp.ne.s32.totalorder %s30, %s33
      %p42 = scmp.eq.s32.totalorder %s25, 1
      %p43 = por %p41, %p42
      %p44 = scmp.ne.s32.totalorder %s33, %s34
      %p45 = scmp.eq.s32.totalorder %s25, 0
      %p46 = por %p44, %p45
      %p47 = scmp.ne.s32.totalorder %s33, %s34
      %p48 = scmp.eq.s32.totalorder %s26, 1
      %p49 = por %p47, %p48
      %p51 = scmp.ne.s32.totalorder %s34, %s50
      %p52 = scmp.eq.s32.totalorder %s26, 0
      %p53 = por %p51, %p52
      %s55 = sadd.s32 %s54, 1
      %p58 = scmp.eq.s32.totalorder %s20, 1
      %p59 = scmp.ne.s32.totalorder %s54, %s56
      %p60 = scmp.eq.s32.totalorder %s20, 0
      %p61 = por %p59, %p60
      %p62 = scmp.ne.s32.totalorder %s54, %s56
      %p63 = scmp.eq.s32.totalorder %s25, 1
      %p64 = por %p62, %p63
      %p65 = scmp.ne.s32.totalorder %s56, %s57
      %p66 = scmp.eq.s32.totalorder %s25, 0
      %p67 = por %p65, %p66
      %p68 = scmp.ne.s32.totalorder %s56, %s57
      %p69 = scmp.eq.s32.totalorder %s26, 1
      %p70 = por %p68, %p69
      %p72 = scmp.ne.s32.totalorder %s57, %s71
      %p73 = scmp.eq.s32.totalorder %s26, 0
      %p74 = por %p72, %p73
      %s76 = sadd.s32 %s75, 1
      %p79 = scmp.eq.s32.totalorder %s20, 1
      %p80 = scmp.ne.s32.totalorder %s75, %s77
      %p81 = scmp.eq.s32.totalorder %s20, 0
      %p82 = por %p80, %p81
      %p83 = scmp.ne.s32.totalorder %s75, %s77
      %p84 = scmp.eq.s32.totalorder %s25, 1
      %p85 = por %p83, %p84
      %p86 = scmp.ne.s32.totalorder %s77, %s78
      %p87 = scmp.eq.s32.totalorder %s25, 0
      %p88 = por %p86, %p87
      %p89 = scmp.ne.s32.totalorder %s77, %s78
      %p90 = scmp.eq.s32.totalorder %s26, 1
      %p91 = por %p89, %p90
      %p93 = scmp.ne.s32.totalorder %s78, %s92
      %p94 = scmp.eq.s32.totalorder %s26, 0
      %p95 = por %p93, %p94
      %s97 = sadd.s32 %s96, 1
      %p100 = scmp.eq.s32.totalorder %s20, 1
      %p101 = scmp.ne.s32.totalorder %s96, %s98
      %p102 = scmp.eq.s32.totalorder %s20, 0
      %p103 = por %p101, %p102
      %p104 = scmp.ne.s32.totalorder %s96, %s98
      %p105 = scmp.eq.s32.totalorder %s25, 1
      %p106 = por %p104, %p105
      %p107 = scmp.ne.s32.totalorder %s98, %s99
      %p108 = scmp.eq.s32.totalorder %s25, 0
      %p109 = por %p107, %p108
      %p110 = scmp.ne.s32.totalorder %s98, %s99
      %p111 = scmp.eq.s32.totalorder %s26, 1
      %p112 = por %p110, %p111
      %p114 = scmp.ne.s32.totalorder %s99, %s113
      %p115 = scmp.eq.s32.totalorder %s26, 0
      %p116 = por %p114, %p115
      %s118 = sadd.s32 %s117, 1
      %p121 = scmp.eq.s32.totalorder %s20, 1
      %p122 = scmp.ne.s32.totalorder %s117, %s119
      %p123 = scmp.eq.s32.totalorder %s20, 0
      %p124 = por %p122, %p123
      %p125 = scmp.ne.s32.totalorder %s117, %s119
      %p126 = scmp.eq.s32.totalorder %s25, 1
      %p127 = por %p125, %p126
      %p128 = scmp.ne.s32.totalorder %s119, %s120
      %p129 = scmp.eq.s32.totalorder %s25, 0
      %p130 = por %p128, %p129
      %p131 = scmp.ne.s32.totalorder %s119, %s120
      %p132 = scmp.eq.s32.totalorder %s26, 1
      %p133 = por %p131, %p132
      %p135 = scmp.ne.s32.totalorder %s120, %s134
      %p136 = scmp.eq.s32.totalorder %s26, 0
      %p137 = por %p135, %p136
      %s139 = sadd.s32 %s138, 1
      %p142 = scmp.eq.s32.totalorder %s20, 1
      %p143 = scmp.ne.s32.totalorder %s138, %s140
      %p144 = scmp.eq.s32.totalorder %s20, 0
      %p145 = por %p143, %p144
      %p146 = scmp.ne.s32.totalorder %s138, %s140
      %p147 = scmp.eq.s32.totalorder %s25, 1
      %p148 = por %p146, %p147
      %p149 = scmp.ne.s32.totalorder %s140, %s141
      %p150 = scmp.eq.s32.totalorder %s25, 0
      %p151 = por %p149, %p150
      %p152 = scmp.ne.s32.totalorder %s140, %s141
      %p153 = scmp.eq.s32.totalorder %s26, 1
      %p154 = por %p152, %p153
      %p156 = scmp.ne.s32.totalorder %s141, %s155
      %p157 = scmp.eq.s32.totalorder %s26, 0
      %p158 = por %p156, %p157
      %s160 = sadd.s32 %s159, 1
      %p163 = scmp.eq.s32.totalorder %s20, 1
      %p164 = scmp.ne.s32.totalorder %s159, %s161
      %p165 = scmp.eq.s32.totalorder %s20, 0
      %p166 = por %p164, %p165
      %p167 = scmp.ne.s32.totalorder %s159, %s161
      %p168 = scmp.eq.s32.totalorder %s25, 1
      %p169 = por %p167, %p168
      %p170 = scmp.ne.s32.totalorder %s161, %s162
      %p171 = scmp.eq.s32.totalorder %s25, 0
      %p172 = por %p170, %p171
      %p173 = scmp.ne.s32.totalorder %s161, %s162
      %p174 = scmp.eq.s32.totalorder %s26, 1
      %p175 = por %p173, %p174
      %p177 = scmp.ne.s32.totalorder %s162, %s176
      %p178 = scmp.eq.s32.totalorder %s26, 0
      %p179 = por %p177, %p178
      %s181 = sadd.s32 %s180, 1
      %p184 = scmp.eq.s32.totalorder %s20, 1
      %p185 = scmp.ne.s32.totalorder %s180, %s182
      %p186 = scmp.eq.s32.totalorder %s20, 0
      %p187 = por %p185, %p186
      %p188 = scmp.ne.s32.totalorder %s180, %s182
      %p189 = scmp.eq.s32.totalorder %s25, 1
      %p190 = por %p188, %p189
      %p191 = scmp.ne.s32.totalorder %s182, %s183
      %p192 = scmp.eq.s32.totalorder %s25, 0
      %p193 = por %p191, %p192
      %p194 = scmp.ne.s32.totalorder %s182, %s183
      %p195 = scmp.eq.s32.totalorder %s26, 1
      %p196 = por %p194, %p195
      %p198 = scmp.ne.s32.totalorder %s183, %s197
      %p199 = scmp.eq.s32.totalorder %s26, 0
      %p200 = por %p198, %p199
      %s201 = ssub.s32 %s20, %s27
      %p202 = scmp.eq.s32.totalorder %s201, 0
      %s204 = sadd.s32 %s203, 1
      %s205 = scalar_select %p202, %s203, %s204
      %p208 = pneg %p202
      %p209 = scmp.eq.s32.totalorder %s20, 1
      %p210 = por %p208, %p209
      %p211 = scmp.ne.s32.totalorder %s203, %s206
      %p212 = scmp.eq.s32.totalorder %s20, 0
      %p213 = por %p211, %p212
      %p214 = scmp.ne.s32.totalorder %s203, %s206
      %p215 = scmp.eq.s32.totalorder %s25, 1
      %p216 = por %p214, %p215
      %p217 = scmp.ne.s32.totalorder %s206, %s207
      %p218 = scmp.eq.s32.totalorder %s25, 0
      %p219 = por %p217, %p218
      %p220 = scmp.ne.s32.totalorder %s206, %s207
      %p221 = scmp.eq.s32.totalorder %s26, 1
      %p222 = por %p220, %p221
      %p224 = scmp.ne.s32.totalorder %s207, %s223
      %p225 = scmp.eq.s32.totalorder %s26, 0
      %p226 = por %p224, %p225
      %p227 = scmp.le.s32.totalorder 1, %s20
      %p228 = scmp.lt.s32.totalorder %s20, 3
      %p229 = pnand %p227, %p228
      %p230 = pneg %p229
      // Predicated region
      $region9: #{tpu_custom_call.1} parent=5 // pred_check
        _
      $region10: #{tpu_custom_call.1} parent=5 // pred_check_branch
        %232 = sbr.rel (%p229) target = $region12
      $region11: #{tpu_custom_call.1} parent=5 // pred_region
        %s233 = ssub.s32 %s20, 1
        // Predicated region
        $region13: #{tpu_custom_call.1} parent=11 // pred_check
          %p234 = pneg %p67
        $region14: #{tpu_custom_call.1} parent=11 // pred_check_branch
          %236 = sbr.rel (%p234) target = $region16
        $region15: #{tpu_custom_call.1} parent=11 // pred_region
          _
        $region16: #{tpu_custom_call.1} parent=11 // pred_fallthru
          _
        // Predicated region
        $region17: #{tpu_custom_call.1} parent=11 // pred_check
          %p237 = pneg %p88
        $region18: #{tpu_custom_call.1} parent=11 // pred_check_branch
          %239 = sbr.rel (%p237) target = $region20
        $region19: #{tpu_custom_call.1} parent=11 // pred_region
          _
        $region20: #{tpu_custom_call.1} parent=11 // pred_fallthru
          _
        // Predicated region
        $region21: #{tpu_custom_call.1} parent=11 // pred_check
          %p240 = pneg %p109
        $region22: #{tpu_custom_call.1} parent=11 // pred_check_branch
          %242 = sbr.rel (%p240) target = $region24
        $region23: #{tpu_custom_call.1} parent=11 // pred_region
          _
        $region24: #{tpu_custom_call.1} parent=11 // pred_fallthru
          _
        // Predicated region
        $region25: #{tpu_custom_call.1} parent=11 // pred_check
          %p243 = pneg %p130
        $region26: #{tpu_custom_call.1} parent=11 // pred_check_branch
          %245 = sbr.rel (%p243) target = $region28
        $region27: #{tpu_custom_call.1} parent=11 // pred_region
          _
        $region28: #{tpu_custom_call.1} parent=11 // pred_fallthru
          _
        // Predicated region
        $region29: #{tpu_custom_call.1} parent=11 // pred_check
          %p246 = pneg %p151
        $region30: #{tpu_custom_call.1} parent=11 // pred_check_branch
          %248 = sbr.rel (%p246) target = $region32
        $region31: #{tpu_custom_call.1} parent=11 // pred_region
          _
        $region32: #{tpu_custom_call.1} parent=11 // pred_fallthru
          _
        // Predicated region
        $region33: #{tpu_custom_call.1} parent=11 // pred_check
          %p249 = pneg %p172
        $region34: #{tpu_custom_call.1} parent=11 // pred_check_branch
          %251 = sbr.rel (%p249) target = $region36
        $region35: #{tpu_custom_call.1} parent=11 // pred_region
          _
        $region36: #{tpu_custom_call.1} parent=11 // pred_fallthru
          _
        // Predicated region
        $region37: #{tpu_custom_call.1} parent=11 // pred_check
          %p252 = pneg %p193
        $region38: #{tpu_custom_call.1} parent=11 // pred_check_branch
          %254 = sbr.rel (%p252) target = $region40
        $region39: #{tpu_custom_call.1} parent=11 // pred_region
          _
        $region40: #{tpu_custom_call.1} parent=11 // pred_fallthru
          _
      $region12: #{tpu_custom_call.1} parent=5 // pred_fallthru
        _
      %p255 = scmp.lt.s32.totalorder %s20, 2
      // Predicated region
      $region41: #{tpu_custom_call.1} parent=5 // pred_check
        %p256 = pneg %p255
      $region42: #{tpu_custom_call.1} parent=5 // pred_check_branch
        %258 = sbr.rel (%p256) target = $region44
      $region43: #{tpu_custom_call.1} parent=5 // pred_region
        // Predicated region
        $region45: #{tpu_custom_call.1} parent=43 // pred_check
          %p259 = pneg %p40
        $region46: #{tpu_custom_call.1} parent=43 // pred_check_branch
          %261 = sbr.rel (%p259) target = $region48
        $region47: #{tpu_custom_call.1} parent=43 // pred_region
          %s262 = sand.u32 %s30, 1
          %s263 = scalar_lea.sflag [#allocation4], %s262
          %s264 = sand.u32 %s30, 1
          %s265 = smul.addr %s264, 16
          %s266 = scalar_lea.vmem [#allocation3], %s265
          %268 = vsyncadd %s263, 0
          %s269 = smul.addr %s20, 2
          %s270 = smul.addr %s269, 8
          %s271 = scalar_lea.hbm %s0, %s270
          %s273 = sshll.u32 %s271, 4
          %s274 = int_to_ptr.hbm [resolvable:$true] %s273
          %s275 = sshll.u32 %s266, 4
          %s276 = int_to_ptr.vmem [resolvable:$true] %s275
          %278 = dma.hbm_to_vmem [thread:$0]  %s274, 256, %s276, %s263
        $region48: #{tpu_custom_call.1} parent=43 // pred_fallthru
          _
      $region44: #{tpu_custom_call.1} parent=5 // pred_fallthru
        _
      %p279 = scmp.le.s32.totalorder 1, %s20
      %p280 = scmp.lt.s32.totalorder %s20, 3
      %p281 = pnand %p279, %p280
      %p282 = pneg %p281
      // Predicated region
      $region49: #{tpu_custom_call.1} parent=5 // pred_check
        _
      $region50: #{tpu_custom_call.1} parent=5 // pred_check_branch
        %284 = sbr.rel (%p281) target = $region52
      $region51: #{tpu_custom_call.1} parent=5 // pred_region
        %s285 = ssub.s32 %s20, 1
        %s286 = sand.u32 %s33, 1
        %s287 = scalar_lea.sflag [#allocation4], %s286
        %s288 = sand.u32 %s33, 1
        %s289 = smul.addr %s288, 16
        %s290 = scalar_lea.vmem [#allocation3], %s289
        // Predicated region
        $region53: #{tpu_custom_call.1} parent=51 // pred_check
          %p291 = pneg %p46
        $region54: #{tpu_custom_call.1} parent=51 // pred_check_branch
          %293 = sbr.rel (%p291) target = $region56
        $region55: #{tpu_custom_call.1} parent=51 // pred_region
          %295 = dma.done %s287, 256
        $region56: #{tpu_custom_call.1} parent=51 // pred_fallthru
          _
        %s296 = sand.u32 %s33, 1
        %s297 = scalar_lea.sflag [#allocation4], %s296
        %s298 = sand.u32 %s33, 1
        %s299 = smul.addr %s298, 16
        %s300 = scalar_lea.vmem [#allocation3], %s299
        %p301 = pneg %p46
        %p302 = pneg %p43
        %p303 = pneg %p67
        %p304 = pneg %p64
        %p305 = pneg %p88
        %p306 = pneg %p85
        %p307 = pneg %p109
        %p308 = pneg %p106
        %p309 = pneg %p130
        %p310 = pneg %p127
        %p311 = pneg %p151
        %p312 = pneg %p148
        %p313 = pneg %p172
        %p314 = pneg %p169
        %p315 = pneg %p193
        %p316 = pneg %p190
        %p317 = pneg %p219
        %p318 = pneg %p216
        %s319 = sand.u32 %s206, 1
        %s320 = scalar_lea.sflag [#allocation5], %s319
        %s321 = sand.u32 %s206, 1
        %s322 = smul.addr %s321, 16
        %s323 = scalar_lea.vmem [#allocation6], %s322
        %v324 = vld [vmem:[%s290] sm:$0xff]
        %v325 = vld [vmem:[%s290 + $0x8] sm:$0xff]
        %v326 = vld [vmem:[%s7] sm:$0xf]
        %v327 = vld [vmem:[%s3] sm:$0xff]
        %329 = vset.pattern.permute.xlu0 0
        %330 = vperm.xlu0 %329, %v327
        %v331 = vpop.permute.xlu0 %330
        %v333 = vmul.f32 %v324, %v331
        %v334 = vmul.f32 %v325, %v331
        %v335 = vld [vmem:[%s4] sm:$0xff]
        %337 = vset.pattern.permute.xlu0 0
        %338 = vperm.xlu0 %337, %v335
        %v339 = vpop.permute.xlu0 %338
        %v341 = vadd.f32 %v333, %v339
        %v342 = vadd.f32 %v334, %v339
        %v343 = vmax.f32 %v341, 0.0
        %v344 = vmax.f32 %v342, 0.0
        %345 = vst [vmem:[#allocation2] sm:$0xff] 0.0
        %346 = vst [vmem:[#allocation2 + $0x8] sm:$0xff] 0.0
        %vm347 = vcmask 277504
        %348 = vst.msk [vmem:[#allocation2 + $0x10] sm:$0xff] %vm347, 0.0
        %351 = vrot.lane.b32.xlu0 %v343, 17
        %v352 = vpop.permute.xlu0 %351
        %353 = vrot.lane.b32.xlu0 %v344, 17
        %v354 = vpop.permute.xlu0 %353
        %vm355 = vcmask 138240
        %v356 = vsel %vm355, %v352, %v354
        %vm360 = vcmask 1047688
        %361 = vst.msk [vmem:[#allocation2] sm:$0xff] %vm360, %v352
        %362 = vst [vmem:[#allocation2 + $0x8] sm:$0xff] %v356
        %363 = vst.msk [vmem:[#allocation2 + $0x10] sm:$0xff] %vm355, %v354
        %v365 = vperm.slane %v326, 0
        %v366 = vperm.slane %v326, 2
        %v369 = vperm.slane %v365, 0
        %v370 = vperm.slane %v366, 0
        %v371 = vperm.slane %v326, 1
        %v372 = vperm.slane %v326, 3
        %v375 = vperm.slane %v371, 1
        %v376 = vperm.slane %v372, 1
        %v377 = vld [vmem:[#allocation2] sm:$0xff]
        %v378 = vld [vmem:[#allocation2 + $0x8] sm:$0xff]
        %v379 = vmul.f32 %v377, %v369
        %v380 = vmul.f32 %v378, %v370
        %v381 = vld [vmem:[#allocation2 + $0x10] sm:$0xff]
        %384 = vrot.lane.b32.xlu0 %v375, 2
        %v385 = vpop.permute.xlu0 %384
        %386 = vrot.lane.b32.xlu0 %v376, 2
        %v387 = vpop.permute.xlu0 %386
        %vm388 = vcmask 15360
        %v389 = vsel %vm388, %v385, %v387
        %v393 = vmul.f32 %v377, %v385
        %v394 = vmul.f32 %v378, %v389
        %v395 = vmul.f32 %v381, %v387
        %398 = vrot.lane.b32.xlu0 %v369, 16
        %v399 = vpop.permute.xlu0 %398
        %400 = vrot.lane.b32.xlu0 %v370, 16
        %v401 = vpop.permute.xlu0 %400
        %vm402 = vcmask 130048
        %v403 = vsel %vm402, %v399, %v401
        %v407 = vmul.f32 %v377, %v399
        %v408 = vmul.f32 %v378, %v403
        %v409 = vmul.f32 %v381, %v401
        %410 = vrot.lane.b32.xlu0 %v375, 18
        %v411 = vpop.permute.xlu0 %410
        %412 = vrot.lane.b32.xlu0 %v376, 18
        %v413 = vpop.permute.xlu0 %412
        %vm414 = vcmask 146432
        %v415 = vsel %vm414, %v411, %v413
        %v419 = vmul.f32 %v377, %v411
        %v420 = vmul.f32 %v378, %v415
        %v421 = vmul.f32 %v381, %v413
        %422 = vrot.lane.b32.xlu0 %v369, 32
        %v423 = vpop.permute.xlu0 %422
        %424 = vrot.lane.b32.xlu0 %v370, 32
        %v425 = vpop.permute.xlu0 %424
        %vm426 = vcmask 261120
        %v427 = vsel %vm426, %v423, %v425
        %v431 = vmul.f32 %v377, %v423
        %v432 = vmul.f32 %v378, %v427
        %v433 = vmul.f32 %v381, %v425
        %434 = vrot.lane.b32.xlu0 %v375, 34
        %v435 = vpop.permute.xlu0 %434
        %436 = vrot.lane.b32.xlu0 %v376, 34
        %v437 = vpop.permute.xlu0 %436
        %v438 = vsel %vm347, %v435, %v437
        %v442 = vmul.f32 %v377, %v435
        %v443 = vmul.f32 %v378, %v438
        %v444 = vmul.f32 %v381, %v437
        %448 = vrot.lane.b32.xlu0 %v377, 127
        %v449 = vpop.permute.xlu0 %448
        %450 = vrot.lane.b32.xlu0 %v378, 127
        %v451 = vpop.permute.xlu0 %450
        %452 = vrot.lane.b32.xlu0 %v381, 127
        %v453 = vpop.permute.xlu0 %452
        %vm454 = vcmask 1039360
        %v455 = vsel %vm454, %v449, %v451
        %v456 = vsel %vm454, %v451, %v453
        %462 = vrot.lane.b32.xlu0 %v393, 126
        %v463 = vpop.permute.xlu0 %462
        %464 = vrot.lane.b32.xlu0 %v394, 126
        %v465 = vpop.permute.xlu0 %464
        %466 = vrot.lane.b32.xlu0 %v395, 126
        %v467 = vpop.permute.xlu0 %466
        %vm468 = vcmask 1031168
        %v469 = vsel %vm468, %v463, %v465
        %v470 = vsel %vm468, %v465, %v467
        %476 = vrot.lane.b32.xlu0 %v407, 112
        %v477 = vpop.permute.xlu0 %476
        %478 = vrot.lane.b32.xlu0 %v408, 112
        %v479 = vpop.permute.xlu0 %478
        %480 = vrot.lane.b32.xlu0 %v409, 112
        %v481 = vpop.permute.xlu0 %480
        %vm482 = vcmask 916480
        %v483 = vsel %vm482, %v477, %v479
        %v484 = vsel %vm482, %v479, %v481
        %487 = vrot.lane.b32.xlu0 %v377, 111
        %v488 = vpop.permute.xlu0 %487
        %489 = vrot.lane.b32.xlu0 %v378, 111
        %v490 = vpop.permute.xlu0 %489
        %491 = vrot.lane.b32.xlu0 %v381, 111
        %v492 = vpop.permute.xlu0 %491
        %vm493 = vcmask 908288
        %v494 = vsel %vm493, %v488, %v490
        %v495 = vsel %vm493, %v490, %v492
        %501 = vrot.lane.b32.xlu0 %v419, 110
        %v502 = vpop.permute.xlu0 %501
        %503 = vrot.lane.b32.xlu0 %v420, 110
        %v504 = vpop.permute.xlu0 %503
        %505 = vrot.lane.b32.xlu0 %v421, 110
        %v506 = vpop.permute.xlu0 %505
        %vm507 = vcmask 900096
        %v508 = vsel %vm507, %v502, %v504
        %v509 = vsel %vm507, %v504, %v506
        %515 = vrot.lane.b32.xlu0 %v431, 96
        %v516 = vpop.permute.xlu0 %515
        %517 = vrot.lane.b32.xlu0 %v432, 96
        %v518 = vpop.permute.xlu0 %517
        %519 = vrot.lane.b32.xlu0 %v433, 96
        %v520 = vpop.permute.xlu0 %519
        %vm521 = vcmask 785408
        %v522 = vsel %vm521, %v516, %v518
        %v523 = vsel %vm521, %v518, %v520
        %526 = vrot.lane.b32.xlu0 %v377, 95
        %v527 = vpop.permute.xlu0 %526
        %528 = vrot.lane.b32.xlu0 %v378, 95
        %v529 = vpop.permute.xlu0 %528
        %530 = vrot.lane.b32.xlu0 %v381, 95
        %v531 = vpop.permute.xlu0 %530
        %vm532 = vcmask 777216
        %v533 = vsel %vm532, %v527, %v529
        %v534 = vsel %vm532, %v529, %v531
        %540 = vrot.lane.b32.xlu0 %v442, 94
        %v541 = vpop.permute.xlu0 %540
        %542 = vrot.lane.b32.xlu0 %v443, 94
        %v543 = vpop.permute.xlu0 %542
        %544 = vrot.lane.b32.xlu0 %v444, 94
        %v545 = vpop.permute.xlu0 %544
        %vm546 = vcmask 769024
        %v547 = vsel %vm546, %v541, %v543
        %v548 = vsel %vm546, %v543, %v545
        %v551 = vld [vmem:[%s1] sm:$0xff]
        %vm552 = vcmask 588800
        %v554 = vsel %vm552, %v551, 0
        %556 = vmatpush.msra.mxu0 0.0
        %557 = vmatpush.msra.mxu0 0.0
        %558 = vmatpush.msra.mxu0 0.0
        %559 = vmatpush.msra.mxu0 0.0
        %560 = vmatpush.msra.mxu0 0.0
        %561 = vmatpush.msra.mxu0 0.0
        %562 = vmatpush.msra.mxu0 0.0
        %563 = vmatpush.msra.mxu0 %v547
        %564 = vmatpush.msra.mxu0 %v533
        %565 = vmatpush.msra.mxu0 %v522
        %566 = vmatpush.msra.mxu0 %v508
        %567 = vmatpush.msra.mxu0 %v494
        %568 = vmatpush.msra.mxu0 %v483
        %569 = vmatpush.msra.mxu0 %v469
        %570 = vmatpush.msra.mxu0 %v455
        %571 = vmatpush.msra.mxu0 %v379
        %572 = vmatmul.f32.gmra.mxu0 %v554
        %v573 = vpop.f32.mrf.mxu0
        %v574 = vadd.f32 0.0, %v573
        %575 = vdwg.mxu0
        %576 = vmatpush.msra.mxu0 0.0
        %577 = vmatpush.msra.mxu0 0.0
        %578 = vmatpush.msra.mxu0 0.0
        %579 = vmatpush.msra.mxu0 0.0
        %580 = vmatpush.msra.mxu0 0.0
        %581 = vmatpush.msra.mxu0 0.0
        %582 = vmatpush.msra.mxu0 0.0
        %583 = vmatpush.msra.mxu0 %v548
        %584 = vmatpush.msra.mxu0 %v534
        %585 = vmatpush.msra.mxu0 %v523
        %586 = vmatpush.msra.mxu0 %v509
        %587 = vmatpush.msra.mxu0 %v495
        %588 = vmatpush.msra.mxu0 %v484
        %589 = vmatpush.msra.mxu0 %v470
        %590 = vmatpush.msra.mxu0 %v456
        %591 = vmatpush.msra.mxu0 %v380
        %592 = vmatmul.f32.gmra.mxu0 %v554
        %v593 = vpop.f32.mrf.mxu0
        %v594 = vadd.f32 0.0, %v593
        %595 = vdwg.mxu0
        %v596 = vld [vmem:[%s5] sm:$0xff]
        %598 = vset.pattern.permute.xlu0 0
        %599 = vperm.xlu0 %598, %v596
        %v600 = vpop.permute.xlu0 %599
        %v602 = vmul.f32 %v574, %v600
        %v603 = vmul.f32 %v594, %v600
        %v604 = vld [vmem:[%s6] sm:$0xff]
        %606 = vset.pattern.permute.xlu0 0
        %607 = vperm.xlu0 %606, %v604
        %v608 = vpop.permute.xlu0 %607
        %v610 = vadd.f32 %v602, %v608
        %v611 = vadd.f32 %v603, %v608
        %v612 = vmax.f32 %v610, 0.0
        %v613 = vmax.f32 %v611, 0.0
        %614 = vst [vmem:[#allocation2] sm:$0xff] 0.0
        %615 = vst [vmem:[#allocation2 + $0x8] sm:$0xff] 0.0
        %616 = vst.msk [vmem:[#allocation2 + $0x10] sm:$0xff] %vm347, 0.0
        %619 = vrot.lane.b32.xlu0 %v612, 17
        %v620 = vpop.permute.xlu0 %619
        %621 = vrot.lane.b32.xlu0 %v613, 17
        %v622 = vpop.permute.xlu0 %621
        %v623 = vsel %vm355, %v620, %v622
        %627 = vst.msk [vmem:[#allocation2] sm:$0xff] %vm360, %v620
        %628 = vst [vmem:[#allocation2 + $0x8] sm:$0xff] %v623
        %629 = vst.msk [vmem:[#allocation2 + $0x10] sm:$0xff] %vm355, %v622
        %v630 = vld [vmem:[#allocation2] sm:$0xff]
        %v631 = vld [vmem:[#allocation2 + $0x8] sm:$0xff]
        %v632 = vmul.f32 %v630, %v369
        %v633 = vmul.f32 %v631, %v370
        %v634 = vld [vmem:[#allocation2 + $0x10] sm:$0xff]
        %v635 = vmul.f32 %v630, %v385
        %v636 = vmul.f32 %v631, %v389
        %v637 = vmul.f32 %v634, %v387
        %v638 = vmul.f32 %v630, %v399
        %v639 = vmul.f32 %v631, %v403
        %v640 = vmul.f32 %v634, %v401
        %v641 = vmul.f32 %v630, %v411
        %v642 = vmul.f32 %v631, %v415
        %v643 = vmul.f32 %v634, %v413
        %v644 = vmul.f32 %v630, %v423
        %v645 = vmul.f32 %v631, %v427
        %v646 = vmul.f32 %v634, %v425
        %v647 = vmul.f32 %v630, %v435
        %v648 = vmul.f32 %v631, %v438
        %v649 = vmul.f32 %v634, %v437
        %653 = vrot.lane.b32.xlu0 %v630, 127
        %v654 = vpop.permute.xlu0 %653
        %655 = vrot.lane.b32.xlu0 %v631, 127
        %v656 = vpop.permute.xlu0 %655
        %657 = vrot.lane.b32.xlu0 %v634, 127
        %v658 = vpop.permute.xlu0 %657
        %v659 = vsel %vm454, %v654, %v656
        %v660 = vsel %vm454, %v656, %v658
        %666 = vrot.lane.b32.xlu0 %v635, 126
        %v667 = vpop.permute.xlu0 %666
        %668 = vrot.lane.b32.xlu0 %v636, 126
        %v669 = vpop.permute.xlu0 %668
        %670 = vrot.lane.b32.xlu0 %v637, 126
        %v671 = vpop.permute.xlu0 %670
        %v672 = vsel %vm468, %v667, %v669
        %v673 = vsel %vm468, %v669, %v671
        %679 = vrot.lane.b32.xlu0 %v638, 112
        %v680 = vpop.permute.xlu0 %679
        %681 = vrot.lane.b32.xlu0 %v639, 112
        %v682 = vpop.permute.xlu0 %681
        %683 = vrot.lane.b32.xlu0 %v640, 112
        %v684 = vpop.permute.xlu0 %683
        %v685 = vsel %vm482, %v680, %v682
        %v686 = vsel %vm482, %v682, %v684
        %689 = vrot.lane.b32.xlu0 %v630, 111
        %v690 = vpop.permute.xlu0 %689
        %691 = vrot.lane.b32.xlu0 %v631, 111
        %v692 = vpop.permute.xlu0 %691
        %693 = vrot.lane.b32.xlu0 %v634, 111
        %v694 = vpop.permute.xlu0 %693
        %v695 = vsel %vm493, %v690, %v692
        %v696 = vsel %vm493, %v692, %v694
        %702 = vrot.lane.b32.xlu0 %v641, 110
        %v703 = vpop.permute.xlu0 %702
        %704 = vrot.lane.b32.xlu0 %v642, 110
        %v705 = vpop.permute.xlu0 %704
        %706 = vrot.lane.b32.xlu0 %v643, 110
        %v707 = vpop.permute.xlu0 %706
        %v708 = vsel %vm507, %v703, %v705
        %v709 = vsel %vm507, %v705, %v707
        %715 = vrot.lane.b32.xlu0 %v644, 96
        %v716 = vpop.permute.xlu0 %715
        %717 = vrot.lane.b32.xlu0 %v645, 96
        %v718 = vpop.permute.xlu0 %717
        %719 = vrot.lane.b32.xlu0 %v646, 96
        %v720 = vpop.permute.xlu0 %719
        %v721 = vsel %vm521, %v716, %v718
        %v722 = vsel %vm521, %v718, %v720
        %725 = vrot.lane.b32.xlu0 %v630, 95
        %v726 = vpop.permute.xlu0 %725
        %727 = vrot.lane.b32.xlu0 %v631, 95
        %v728 = vpop.permute.xlu0 %727
        %729 = vrot.lane.b32.xlu0 %v634, 95
        %v730 = vpop.permute.xlu0 %729
        %v731 = vsel %vm532, %v726, %v728
        %v732 = vsel %vm532, %v728, %v730
        %738 = vrot.lane.b32.xlu0 %v647, 94
        %v739 = vpop.permute.xlu0 %738
        %740 = vrot.lane.b32.xlu0 %v648, 94
        %v741 = vpop.permute.xlu0 %740
        %742 = vrot.lane.b32.xlu0 %v649, 94
        %v743 = vpop.permute.xlu0 %742
        %v744 = vsel %vm546, %v739, %v741
        %v745 = vsel %vm546, %v741, %v743
        %v748 = vld [vmem:[%s2] sm:$0xff]
        %vm749 = vcmask 654336
        %v751 = vsel %vm749, %v748, 0
        %753 = vmatpush.msra.mxu0 0.0
        %754 = vmatpush.msra.mxu0 0.0
        %755 = vmatpush.msra.mxu0 0.0
        %756 = vmatpush.msra.mxu0 0.0
        %757 = vmatpush.msra.mxu0 0.0
        %758 = vmatpush.msra.mxu0 0.0
        %759 = vmatpush.msra.mxu0 %v324
        %760 = vmatpush.msra.mxu0 %v744
        %761 = vmatpush.msra.mxu0 %v731
        %762 = vmatpush.msra.mxu0 %v721
        %763 = vmatpush.msra.mxu0 %v708
        %764 = vmatpush.msra.mxu0 %v695
        %765 = vmatpush.msra.mxu0 %v685
        %766 = vmatpush.msra.mxu0 %v672
        %767 = vmatpush.msra.mxu0 %v659
        %768 = vmatpush.msra.mxu0 %v632
        %769 = vmatmul.f32.gmra.mxu0 %v751
        %v770 = vpop.f32.mrf.mxu0
        %v771 = vadd.f32 0.0, %v770
        %772 = vdwg.mxu0
        %773 = vmatpush.msra.mxu0 0.0
        %774 = vmatpush.msra.mxu0 0.0
        %775 = vmatpush.msra.mxu0 0.0
        %776 = vmatpush.msra.mxu0 0.0
        %777 = vmatpush.msra.mxu0 0.0
        %778 = vmatpush.msra.mxu0 0.0
        %779 = vmatpush.msra.mxu0 %v325
        %780 = vmatpush.msra.mxu0 %v745
        %781 = vmatpush.msra.mxu0 %v732
        %782 = vmatpush.msra.mxu0 %v722
        %783 = vmatpush.msra.mxu0 %v709
        %784 = vmatpush.msra.mxu0 %v696
        %785 = vmatpush.msra.mxu0 %v686
        %786 = vmatpush.msra.mxu0 %v673
        %787 = vmatpush.msra.mxu0 %v660
        %788 = vmatpush.msra.mxu0 %v633
        %789 = vmatmul.f32.gmra.mxu0 %v751
        %v790 = vpop.f32.mrf.mxu0
        %v791 = vadd.f32 0.0, %v790
        %792 = vdwg.mxu0
        %793 = vst [vmem:[%s323] sm:$0xff] %v771
        %794 = vst [vmem:[%s323 + $0x8] sm:$0xff] %v791
        %s795 = sand.u32 %s206, 1
        %s796 = scalar_lea.sflag [#allocation5], %s795
        %s797 = sand.u32 %s206, 1
        %s798 = smul.addr %s797, 16
        %s799 = scalar_lea.vmem [#allocation6], %s798
        // Predicated region
        $region57: #{tpu_custom_call.1} parent=51 // pred_check
          %p800 = pneg %p216
        $region58: #{tpu_custom_call.1} parent=51 // pred_check_branch
          %802 = sbr.rel (%p800) target = $region60
        $region59: #{tpu_custom_call.1} parent=51 // pred_region
          %804 = vsyncadd %s796, 0
          %s805 = smul.addr %s25, 2
          %s806 = smul.addr %s805, 8
          %s807 = scalar_lea.hbm %s8, %s806
          %s809 = sshll.u32 %s799, 4
          %s810 = int_to_ptr.vmem [resolvable:$true] %s809
          %s811 = sshll.u32 %s807, 4
          %s812 = int_to_ptr.hbm [resolvable:$true] %s811
          %814 = dma.vmem_to_hbm [thread:$0]  %s810, 256, %s812, %s796
        $region60: #{tpu_custom_call.1} parent=51 // pred_fallthru
          _
      $region52: #{tpu_custom_call.1} parent=5 // pred_fallthru
        _
      %p815 = scmp.le.s32.totalorder 2, %s20
      // Predicated region
      $region61: #{tpu_custom_call.1} parent=5 // pred_check
        %p816 = pneg %p815
      $region62: #{tpu_custom_call.1} parent=5 // pred_check_branch
        %818 = sbr.rel (%p816) target = $region64
      $region63: #{tpu_custom_call.1} parent=5 // pred_region
        %s819 = ssub.s32 %s20, 2
        // Predicated region
        $region65: #{tpu_custom_call.1} parent=63 // pred_check
          %p820 = pneg %p222
        $region66: #{tpu_custom_call.1} parent=63 // pred_check_branch
          %822 = sbr.rel (%p820) target = $region68
        $region67: #{tpu_custom_call.1} parent=63 // pred_region
          %s823 = sand.u32 %s207, 1
          %s824 = scalar_lea.sflag [#allocation5], %s823
          %s825 = sand.u32 %s207, 1
          %s826 = smul.addr %s825, 16
          %s827 = scalar_lea.vmem [#allocation6], %s826
          %829 = dma.done %s824, 256
        $region68: #{tpu_custom_call.1} parent=63 // pred_fallthru
          _
      $region64: #{tpu_custom_call.1} parent=5 // pred_fallthru
        _
    $region6: #{tpu_custom_call.1} parent=1 // loop_footer
      %s24 = sadd.s32 1, %s20
    $region7: #{tpu_custom_call.1} parent=1 // loop_footer_branch
      %19 = sbr.rel target = $region3
    $region8: #{tpu_custom_call.1} parent=1 // loop_exit
      _
    %830 = vsyncpa [#allocation4], 1
    %s831 = scalar_lea.sflag [#allocation4], 1
    %832 = vsyncpa %s831, 1
    %833 = vsyncpa [#allocation5], 1
    %s834 = scalar_lea.sflag [#allocation5], 1
    %835 = vsyncpa %s834, 1

</llo_original>
